<compile_context>
chip_gen: v7x
topology: tpu7x:2x2x1
jax: 0.10.0
libtpu: 0.0.40
codegen_flags: <defaults>
</compile_context>

<pallas_src>
import jax
import jax.numpy as jnp
import numpy as np
from jax import lax
from jax.experimental import pallas as pl
from jax.experimental.pallas import tpu as pltpu

EPS_ATTN = 1e-4  # fast-attention normalization epsilon (EfficientDet default)

# Tap offsets (dh, dw) of the 3x3 depthwise conv, kh-major order.  The fused
# weight, the border masks and the in-kernel im2col all use this ordering.
TAPS = tuple((kh - 1, kw - 1) for kh in range(3) for kw in range(3))


def _make_fnode_kernel(num_in, C, W, HW):
    PAD = W + 1  # covers the largest flat shift |dh*W + dw| = W + 1

    def kernel(ew_ref, *args):
        """One image per grid step.

        ew_ref    : SMEM (num_in,)        raw fast-attention edge weights
        x_refs    : VMEM (1, C, HW) x num_in   flat-NCHW inputs (lane-dense)
        wct_ref   : VMEM (C, 9C) bf16     fused depthwise*pointwise weight
        mask_ref  : VMEM (9, 1, HW)       per-tap border (zero-pad) masks
        scale_ref : VMEM (C, 1)           folded BN scale
        bias_ref  : VMEM (C, 1)           folded BN bias
        o_ref     : VMEM (1, C, HW)
        """
        x_refs = args[:num_in]
        wct_ref, mask_ref, scale_ref, bias_ref, o_ref = args[num_in:]

        # ---- combine: fast-attention weighted fusion (scalar weights, SMEM) ----
        ws = [jnp.maximum(ew_ref[i], 0.0) for i in range(num_in)]
        denom = ws[0]
        for w in ws[1:]:
            denom = denom + w
        denom = denom + EPS_ATTN

        fused = (ws[0] / denom) * x_refs[0][0]              # (C, HW) f32
        for i in range(1, num_in):
            fused = fused + (ws[i] / denom) * x_refs[i][0]

        # ---- after_combine: SiLU (EUP sigmoid) ----
        act = fused * jax.nn.sigmoid(fused)                 # (C, HW) f32

        # ---- im2col along lanes: 9 shifted + masked copies of act ----
        zpad = jnp.zeros((C, PAD), jnp.float32)
        act_p = jnp.concatenate([zpad, act, zpad], axis=1)  # (C, HW + 2*PAD)

        pieces = []
        for t, (dh, dw) in enumerate(TAPS):
            s = dh * W + dw                                 # flat shift of this tap
            shifted = act_p[:, PAD + s:PAD + s + HW]        # (C, HW), static lane shift
            shifted = shifted * mask_ref[t]                 # (1, HW) zero-pad mask
            pieces.append(shifted.astype(jnp.bfloat16))
        big = jnp.concatenate(pieces, axis=0)               # (9C, HW) bf16

        # ---- fused depthwise + pointwise conv on the MXU + folded BatchNorm ----
        y = jnp.dot(wct_ref[...], big,
                    preferred_element_type=jnp.float32)     # (C, HW) f32
        y = y * scale_ref[...] + bias_ref[...]
        o_ref[...] = y.reshape(1, C, HW).astype(o_ref.dtype)

    return kernel


def fnode_pallas(xs_nchw, edge_w, dw_w, pw_w, bn_gamma, bn_beta, bn_mean, bn_var,
                 bn_eps=1e-3):
    """xs_nchw: list of (N, C, H, W) float32 arrays (same shape).
       dw_w: (C, 1, 3, 3) depthwise weight; pw_w: (C, C, 1, 1) pointwise weight."""
    # TODO(synk): FpnCombine's spatial resampling (interpolate / max-pool) of
    # mismatched-resolution inputs is not implemented; all inputs are assumed
    # to already be at the node's target resolution.
    num_in = len(xs_nchw)
    N, C, H, W = xs_nchw[0].shape
    HW = H * W

    # Flat NCHW views: pure reshapes, no extra HBM traffic.
    xs_flat = [x.reshape(N, C, HW) for x in xs_nchw]

    # Fused depthwise*pointwise weight, laid out (Cout, 9*Cin), bf16 for the MXU.
    dw3 = dw_w[:, 0]                                        # (Cin, 3, 3)
    pw2 = pw_w[:, :, 0, 0]                                  # (Cout, Cin)
    wct = jnp.einsum("ckl,oc->oklc", dw3, pw2).reshape(C, 9 * C).astype(jnp.bfloat16)

    # Folded BatchNorm (eval mode) as per-channel scale/bias, shaped (C, 1).
    inv_std = 1.0 / jnp.sqrt(bn_var + bn_eps)
    scale = (bn_gamma * inv_std).reshape(C, 1).astype(jnp.float32)
    bias = (bn_beta - bn_mean * bn_gamma * inv_std).reshape(C, 1).astype(jnp.float32)

    # Per-tap validity masks implementing the conv's zero padding in flat-HW
    # coordinates (static, host-precomputed, tiny).
    rows = np.arange(HW, dtype=np.int64) // W
    cols = np.arange(HW, dtype=np.int64) % W
    masks = np.stack(
        [((rows + dh >= 0) & (rows + dh < H) & (cols + dw >= 0) & (cols + dw < W))
         .astype(np.float32) for dh, dw in TAPS])
    masks = jnp.asarray(masks).reshape(9, 1, HW)

    kernel = _make_fnode_kernel(num_in, C, W, HW)

    in_specs = [pl.BlockSpec(memory_space=pltpu.MemorySpace.SMEM)]           # edge weights
    in_specs += [pl.BlockSpec((1, C, HW), lambda n: (n, 0, 0))
                 for _ in range(num_in)]                                     # inputs
    in_specs += [
        pl.BlockSpec((C, 9 * C), lambda n: (0, 0)),                          # fused conv weight
        pl.BlockSpec((9, 1, HW), lambda n: (0, 0, 0)),                       # border masks
        pl.BlockSpec((C, 1), lambda n: (0, 0)),                              # bn scale
        pl.BlockSpec((C, 1), lambda n: (0, 0)),                              # bn bias
    ]

    # TODO(synk): for large BiFPN levels, add an H-tile grid axis with a 1-row
    # halo (manual DMA) so the per-step block stays well under v7x's VMEM.
    out_flat = pl.pallas_call(
        kernel,
        out_shape=jax.ShapeDtypeStruct((N, C, HW), jnp.float32),
        grid=(N,),
        in_specs=in_specs,
        out_specs=pl.BlockSpec((1, C, HW), lambda n: (n, 0, 0)),
        compiler_params=pltpu.CompilerParams(
            dimension_semantics=("parallel",),
            vmem_limit_bytes=32 * 1024 * 1024),
    )(edge_w.astype(jnp.float32), *xs_flat, wct, masks, scale, bias)

    return out_flat.reshape(N, C, H, W)


def fnode_ref(xs_nchw, edge_w, dw_w, pw_w, bn_gamma, bn_beta, bn_mean, bn_var,
              bn_eps=1e-3):
    """Pure-JAX reference matching the PyTorch semantics."""
    num_in = len(xs_nchw)
    C = xs_nchw[0].shape[1]
    w = jnp.maximum(edge_w, 0.0)
    w = w / (jnp.sum(w) + EPS_ATTN)
    fused = sum(w[i] * xs_nchw[i] for i in range(num_in))         # NCHW
    act = fused * jax.nn.sigmoid(fused)                           # SiLU
    x = jnp.transpose(act, (0, 2, 3, 1))                          # NHWC
    dw_k = jnp.transpose(dw_w[:, 0], (1, 2, 0)).reshape(3, 3, 1, C)
    y = lax.conv_general_dilated(
        x, dw_k, window_strides=(1, 1), padding="SAME",
        dimension_numbers=("NHWC", "HWIO", "NHWC"), feature_group_count=C)
    y = jnp.einsum("nhwc,oc->nhwo", y, pw_w[:, :, 0, 0])
    inv_std = 1.0 / jnp.sqrt(bn_var + bn_eps)
    y = y * (bn_gamma * inv_std) + (bn_beta - bn_mean * bn_gamma * inv_std)
    return jnp.transpose(y, (0, 3, 1, 2))                         # NCHW


if __name__ == "__main__":
    key = jax.random.PRNGKey(0)
    ks = jax.random.split(key, 10)

    N, C, H, W = 2, 8, 16, 16
    num_in = 2

    # Inputs (list of feature maps, as FNode.forward expects).
    x0 = jax.random.normal(ks[0], (N, C, H, W), jnp.float32)
    x1 = jax.random.normal(ks[1], (N, C, H, W), jnp.float32)

    # Deterministic synthetic parameters (shapes from the module's __init__).
    edge_w = jnp.ones((num_in,), jnp.float32) + 0.1 * jax.random.normal(ks[2], (num_in,), jnp.float32)
    dw_w = 0.2 * jax.random.normal(ks[3], (C, 1, 3, 3), jnp.float32)   # depthwise conv
    pw_w = 0.2 * jax.random.normal(ks[4], (C, C, 1, 1), jnp.float32)   # pointwise conv
    bn_gamma = 1.0 + 0.1 * jax.random.normal(ks[5], (C,), jnp.float32)
    bn_beta = 0.1 * jax.random.normal(ks[6], (C,), jnp.float32)
    bn_mean = 0.1 * jax.random.normal(ks[7], (C,), jnp.float32)
    bn_var = jnp.abs(1.0 + 0.1 * jax.random.normal(ks[8], (C,), jnp.float32))

    out = fnode_pallas([x0, x1], edge_w, dw_w, pw_w, bn_gamma, bn_beta, bn_mean, bn_var)
    out = jax.block_until_ready(out)

    ref = fnode_ref([x0, x1], edge_w, dw_w, pw_w, bn_gamma, bn_beta, bn_mean, bn_var)
    err = float(np.max(np.abs(np.asarray(out) - np.asarray(ref))))
    # bf16 MXU operands (f32 accumulation) -> use a bf16-appropriate tolerance.
    assert np.allclose(np.asarray(out), np.asarray(ref), atol=2e-2, rtol=2e-2), err

    print("KERNEL_OK")
</pallas_src>

<mosaic_0001>
module attributes {stable_mosaic.version = 11 : i64} {
  func.func @kernel(%arg0: i32, %arg1: memref<2xf32, #tpu.memory_space<smem>>, %arg2: memref<1x8x256xf32, #tpu.memory_space<vmem>>, %arg3: memref<1x8x256xf32, #tpu.memory_space<vmem>>, %arg4: memref<8x72xbf16, #tpu.memory_space<vmem>>, %arg5: memref<9x1x256xf32, #tpu.memory_space<vmem>>, %arg6: memref<8x1xf32, #tpu.memory_space<vmem>>, %arg7: memref<8x1xf32, #tpu.memory_space<vmem>>, %arg8: memref<1x8x256xf32, #tpu.memory_space<vmem>>) attributes {dimension_semantics = [#tpu.dimension_semantics<parallel>], iteration_bounds = array<i64: 2>, scalar_prefetch = 0 : i64, scratch_operands = 0 : i64, tpu.core_type = #tpu.core_type<tc>, window_params = [{transform_indices = @transform_0, window_bounds = array<i64: 2>}, {transform_indices = @transform_1, window_bounds = array<i64: 1, 8, 256>}, {transform_indices = @transform_2, window_bounds = array<i64: 1, 8, 256>}, {pipeline_mode = #tpu.pipeline_mode<synchronous>, transform_indices = @transform_3, window_bounds = array<i64: 8, 72>}, {pipeline_mode = #tpu.pipeline_mode<synchronous>, transform_indices = @transform_4, window_bounds = array<i64: 9, 1, 256>}, {pipeline_mode = #tpu.pipeline_mode<synchronous>, transform_indices = @transform_5, window_bounds = array<i64: 8, 1>}, {pipeline_mode = #tpu.pipeline_mode<synchronous>, transform_indices = @transform_6, window_bounds = array<i64: 8, 1>}, {transform_indices = @transform_7, window_bounds = array<i64: 1, 8, 256>}]} {
    %c0 = arith.constant 0 : index
    %0 = memref.load %arg1[%c0] : memref<2xf32, #tpu.memory_space<smem>>
    %cst = arith.constant 0.000000e+00 : f32
    %1 = arith.maximumf %0, %cst : f32
    %c1 = arith.constant 1 : index
    %2 = memref.load %arg1[%c1] : memref<2xf32, #tpu.memory_space<smem>>
    %cst_0 = arith.constant 0.000000e+00 : f32
    %3 = arith.maximumf %2, %cst_0 : f32
    %4 = arith.addf %1, %3 : f32
    %cst_1 = arith.constant 9.99999974E-5 : f32
    %5 = arith.addf %4, %cst_1 : f32
    %6 = arith.divf %1, %5 : f32
    %c0_2 = arith.constant 0 : index
    %c0_3 = arith.constant 0 : index
    %c0_4 = arith.constant 0 : index
    %7 = vector.load %arg2[%c0_2, %c0_3, %c0_4] : memref<1x8x256xf32, #tpu.memory_space<vmem>>, vector<1x8x256xf32>
    %8 = vector.shape_cast %7 : vector<1x8x256xf32> to vector<8x256xf32>
    %9 = vector.broadcast %6 : f32 to vector<8x256xf32>
    %10 = arith.mulf %9, %8 : vector<8x256xf32>
    %11 = arith.divf %3, %5 : f32
    %c0_5 = arith.constant 0 : index
    %c0_6 = arith.constant 0 : index
    %c0_7 = arith.constant 0 : index
    %12 = vector.load %arg3[%c0_5, %c0_6, %c0_7] : memref<1x8x256xf32, #tpu.memory_space<vmem>>, vector<1x8x256xf32>
    %13 = vector.shape_cast %12 : vector<1x8x256xf32> to vector<8x256xf32>
    %14 = vector.broadcast %11 : f32 to vector<8x256xf32>
    %15 = arith.mulf %14, %13 : vector<8x256xf32>
    %16 = arith.addf %10, %15 : vector<8x256xf32>
    %17 = arith.negf %16 : vector<8x256xf32>
    %18 = math.exp %17 : vector<8x256xf32>
    %cst_8 = arith.constant 1.000000e+00 : f32
    %19 = vector.broadcast %cst_8 : f32 to vector<8x256xf32>
    %20 = arith.addf %19, %18 : vector<8x256xf32>
    %21 = arith.divf %19, %20 : vector<8x256xf32>
    %22 = arith.mulf %16, %21 : vector<8x256xf32>
    %cst_9 = arith.constant 0.000000e+00 : f32
    %23 = vector.broadcast %cst_9 : f32 to vector<8x17xf32>
    %24 = tpu.concatenate %23, %22, %23 in 1 : vector<8x17xf32>, vector<8x256xf32>, vector<8x17xf32> -> vector<8x290xf32>
    %25 = vector.extract_strided_slice %24 {offsets = [0, 0], sizes = [8, 256], strides = [1, 1]} : vector<8x290xf32> to vector<8x256xf32>
    %c0_10 = arith.constant 0 : index
    %c0_11 = arith.constant 0 : index
    %c0_12 = arith.constant 0 : index
    %26 = vector.load %arg5[%c0_10, %c0_11, %c0_12] : memref<9x1x256xf32, #tpu.memory_space<vmem>>, vector<1x1x256xf32>
    %27 = vector.shape_cast %26 : vector<1x1x256xf32> to vector<1x256xf32>
    %28 = vector.broadcast %27 : vector<1x256xf32> to vector<8x256xf32>
    %29 = arith.mulf %25, %28 : vector<8x256xf32>
    %30 = arith.truncf %29 : vector<8x256xf32> to vector<8x256xbf16>
    %31 = vector.extract_strided_slice %24 {offsets = [0, 1], sizes = [8, 256], strides = [1, 1]} : vector<8x290xf32> to vector<8x256xf32>
    %c1_13 = arith.constant 1 : index
    %c0_14 = arith.constant 0 : index
    %c0_15 = arith.constant 0 : index
    %32 = vector.load %arg5[%c1_13, %c0_14, %c0_15] : memref<9x1x256xf32, #tpu.memory_space<vmem>>, vector<1x1x256xf32>
    %33 = vector.shape_cast %32 : vector<1x1x256xf32> to vector<1x256xf32>
    %34 = vector.broadcast %33 : vector<1x256xf32> to vector<8x256xf32>
    %35 = arith.mulf %31, %34 : vector<8x256xf32>
    %36 = arith.truncf %35 : vector<8x256xf32> to vector<8x256xbf16>
    %37 = vector.extract_strided_slice %24 {offsets = [0, 2], sizes = [8, 256], strides = [1, 1]} : vector<8x290xf32> to vector<8x256xf32>
    %c2 = arith.constant 2 : index
    %c0_16 = arith.constant 0 : index
    %c0_17 = arith.constant 0 : index
    %38 = vector.load %arg5[%c2, %c0_16, %c0_17] : memref<9x1x256xf32, #tpu.memory_space<vmem>>, vector<1x1x256xf32>
    %39 = vector.shape_cast %38 : vector<1x1x256xf32> to vector<1x256xf32>
    %40 = vector.broadcast %39 : vector<1x256xf32> to vector<8x256xf32>
    %41 = arith.mulf %37, %40 : vector<8x256xf32>
    %42 = arith.truncf %41 : vector<8x256xf32> to vector<8x256xbf16>
    %43 = vector.extract_strided_slice %24 {offsets = [0, 16], sizes = [8, 256], strides = [1, 1]} : vector<8x290xf32> to vector<8x256xf32>
    %c3 = arith.constant 3 : index
    %c0_18 = arith.constant 0 : index
    %c0_19 = arith.constant 0 : index
    %44 = vector.load %arg5[%c3, %c0_18, %c0_19] : memref<9x1x256xf32, #tpu.memory_space<vmem>>, vector<1x1x256xf32>
    %45 = vector.shape_cast %44 : vector<1x1x256xf32> to vector<1x256xf32>
    %46 = vector.broadcast %45 : vector<1x256xf32> to vector<8x256xf32>
    %47 = arith.mulf %43, %46 : vector<8x256xf32>
    %48 = arith.truncf %47 : vector<8x256xf32> to vector<8x256xbf16>
    %49 = vector.extract_strided_slice %24 {offsets = [0, 17], sizes = [8, 256], strides = [1, 1]} : vector<8x290xf32> to vector<8x256xf32>
    %c4 = arith.constant 4 : index
    %c0_20 = arith.constant 0 : index
    %c0_21 = arith.constant 0 : index
    %50 = vector.load %arg5[%c4, %c0_20, %c0_21] : memref<9x1x256xf32, #tpu.memory_space<vmem>>, vector<1x1x256xf32>
    %51 = vector.shape_cast %50 : vector<1x1x256xf32> to vector<1x256xf32>
    %52 = vector.broadcast %51 : vector<1x256xf32> to vector<8x256xf32>
    %53 = arith.mulf %49, %52 : vector<8x256xf32>
    %54 = arith.truncf %53 : vector<8x256xf32> to vector<8x256xbf16>
    %55 = vector.extract_strided_slice %24 {offsets = [0, 18], sizes = [8, 256], strides = [1, 1]} : vector<8x290xf32> to vector<8x256xf32>
    %c5 = arith.constant 5 : index
    %c0_22 = arith.constant 0 : index
    %c0_23 = arith.constant 0 : index
    %56 = vector.load %arg5[%c5, %c0_22, %c0_23] : memref<9x1x256xf32, #tpu.memory_space<vmem>>, vector<1x1x256xf32>
    %57 = vector.shape_cast %56 : vector<1x1x256xf32> to vector<1x256xf32>
    %58 = vector.broadcast %57 : vector<1x256xf32> to vector<8x256xf32>
    %59 = arith.mulf %55, %58 : vector<8x256xf32>
    %60 = arith.truncf %59 : vector<8x256xf32> to vector<8x256xbf16>
    %61 = vector.extract_strided_slice %24 {offsets = [0, 32], sizes = [8, 256], strides = [1, 1]} : vector<8x290xf32> to vector<8x256xf32>
    %c6 = arith.constant 6 : index
    %c0_24 = arith.constant 0 : index
    %c0_25 = arith.constant 0 : index
    %62 = vector.load %arg5[%c6, %c0_24, %c0_25] : memref<9x1x256xf32, #tpu.memory_space<vmem>>, vector<1x1x256xf32>
    %63 = vector.shape_cast %62 : vector<1x1x256xf32> to vector<1x256xf32>
    %64 = vector.broadcast %63 : vector<1x256xf32> to vector<8x256xf32>
    %65 = arith.mulf %61, %64 : vector<8x256xf32>
    %66 = arith.truncf %65 : vector<8x256xf32> to vector<8x256xbf16>
    %67 = vector.extract_strided_slice %24 {offsets = [0, 33], sizes = [8, 256], strides = [1, 1]} : vector<8x290xf32> to vector<8x256xf32>
    %c7 = arith.constant 7 : index
    %c0_26 = arith.constant 0 : index
    %c0_27 = arith.constant 0 : index
    %68 = vector.load %arg5[%c7, %c0_26, %c0_27] : memref<9x1x256xf32, #tpu.memory_space<vmem>>, vector<1x1x256xf32>
    %69 = vector.shape_cast %68 : vector<1x1x256xf32> to vector<1x256xf32>
    %70 = vector.broadcast %69 : vector<1x256xf32> to vector<8x256xf32>
    %71 = arith.mulf %67, %70 : vector<8x256xf32>
    %72 = arith.truncf %71 : vector<8x256xf32> to vector<8x256xbf16>
    %73 = vector.extract_strided_slice %24 {offsets = [0, 34], sizes = [8, 256], strides = [1, 1]} : vector<8x290xf32> to vector<8x256xf32>
    %c8 = arith.constant 8 : index
    %c0_28 = arith.constant 0 : index
    %c0_29 = arith.constant 0 : index
    %74 = vector.load %arg5[%c8, %c0_28, %c0_29] : memref<9x1x256xf32, #tpu.memory_space<vmem>>, vector<1x1x256xf32>
    %75 = vector.shape_cast %74 : vector<1x1x256xf32> to vector<1x256xf32>
    %76 = vector.broadcast %75 : vector<1x256xf32> to vector<8x256xf32>
    %77 = arith.mulf %73, %76 : vector<8x256xf32>
    %78 = arith.truncf %77 : vector<8x256xf32> to vector<8x256xbf16>
    %79 = tpu.concatenate %30, %36, %42, %48, %54, %60, %66, %72, %78 in 0 : vector<8x256xbf16>, vector<8x256xbf16>, vector<8x256xbf16>, vector<8x256xbf16>, vector<8x256xbf16>, vector<8x256xbf16>, vector<8x256xbf16>, vector<8x256xbf16>, vector<8x256xbf16> -> vector<72x256xbf16>
    %c0_30 = arith.constant 0 : index
    %c0_31 = arith.constant 0 : index
    %80 = vector.load %arg4[%c0_30, %c0_31] : memref<8x72xbf16, #tpu.memory_space<vmem>>, vector<8x72xbf16>
    %cst_32 = arith.constant dense<0.000000e+00> : vector<8x256xf32>
    %81 = tpu.matmul %80, %79, %cst_32 {dimension_numbers = #tpu.dot_dimension_numbers<[1], [0], [0], [1], [0, 0, 1, 1], [], []>} : vector<8x72xbf16>, vector<72x256xbf16>, vector<8x256xf32> -> vector<8x256xf32>
    %c0_33 = arith.constant 0 : index
    %c0_34 = arith.constant 0 : index
    %82 = vector.load %arg6[%c0_33, %c0_34] : memref<8x1xf32, #tpu.memory_space<vmem>>, vector<8x1xf32>
    %83 = vector.broadcast %82 : vector<8x1xf32> to vector<8x256xf32>
    %84 = arith.mulf %81, %83 : vector<8x256xf32>
    %c0_35 = arith.constant 0 : index
    %c0_36 = arith.constant 0 : index
    %85 = vector.load %arg7[%c0_35, %c0_36] : memref<8x1xf32, #tpu.memory_space<vmem>>, vector<8x1xf32>
    %86 = vector.broadcast %85 : vector<8x1xf32> to vector<8x256xf32>
    %87 = arith.addf %84, %86 : vector<8x256xf32>
    %88 = vector.shape_cast %87 : vector<8x256xf32> to vector<1x8x256xf32>
    %c0_37 = arith.constant 0 : index
    %c0_38 = arith.constant 0 : index
    %c0_39 = arith.constant 0 : index
    %89 = vector.load %arg8[%c0_37, %c0_38, %c0_39] : memref<1x8x256xf32, #tpu.memory_space<vmem>>, vector<1x8x256xf32>
    tpu.vector_store %arg8[%c0_37, %c0_38, %c0_39], %88 {strides = array<i32>} : memref<1x8x256xf32, #tpu.memory_space<vmem>>, vector<1x8x256xf32>,
    return
  }
  func.func @transform_0(%arg0: i32) -> i32 {
    %c0_i32 = arith.constant 0 : i32
    %c0_i32_0 = arith.constant 0 : i32
    return %c0_i32 : i32
  }
  func.func @transform_1(%arg0: i32) -> (i32, i32, i32) {
    %c0_i32 = arith.constant 0 : i32
    %c0_i32_0 = arith.constant 0 : i32
    %c0_i32_1 = arith.constant 0 : i32
    return %arg0, %c0_i32, %c0_i32_0 : i32, i32, i32
  }
  func.func @transform_2(%arg0: i32) -> (i32, i32, i32) {
    %c0_i32 = arith.constant 0 : i32
    %c0_i32_0 = arith.constant 0 : i32
    %c0_i32_1 = arith.constant 0 : i32
    return %arg0, %c0_i32, %c0_i32_0 : i32, i32, i32
  }
  func.func @transform_3(%arg0: i32) -> (i32, i32) {
    %c0_i32 = arith.constant 0 : i32
    %c0_i32_0 = arith.constant 0 : i32
    %c0_i32_1 = arith.constant 0 : i32
    return %c0_i32, %c0_i32_0 : i32, i32
  }
  func.func @transform_4(%arg0: i32) -> (i32, i32, i32) {
    %c0_i32 = arith.constant 0 : i32
    %c0_i32_0 = arith.constant 0 : i32
    %c0_i32_1 = arith.constant 0 : i32
    %c0_i32_2 = arith.constant 0 : i32
    return %c0_i32, %c0_i32_0, %c0_i32_1 : i32, i32, i32
  }
  func.func @transform_5(%arg0: i32) -> (i32, i32) {
    %c0_i32 = arith.constant 0 : i32
    %c0_i32_0 = arith.constant 0 : i32
    %c0_i32_1 = arith.constant 0 : i32
    return %c0_i32, %c0_i32_0 : i32, i32
  }
  func.func @transform_6(%arg0: i32) -> (i32, i32) {
    %c0_i32 = arith.constant 0 : i32
    %c0_i32_0 = arith.constant 0 : i32
    %c0_i32_1 = arith.constant 0 : i32
    return %c0_i32, %c0_i32_0 : i32, i32
  }
  func.func @transform_7(%arg0: i32) -> (i32, i32, i32) {
    %c0_i32 = arith.constant 0 : i32
    %c0_i32_0 = arith.constant 0 : i32
    %c0_i32_1 = arith.constant 0 : i32
    return %arg0, %c0_i32, %c0_i32_0 : i32, i32, i32
  }
}

</mosaic_0001>

<llo_original>
// kernel: tpu_custom_call.1
$region0: #{tpu_custom_call.1}
  #allocation0 [shape = 'u32[]', space=smem, size = 0x4, offset = 0x4, fixed_abs, tag = 'smem constant byte address 0x4 - core index']
  #allocation1 [shape = 'u32[144,128]{1,0:T(1,128)}', space=vmem, size = 0x12000, scoped, tag = 'internal scratch']
  %s0 = inlined_call_operand.vmem [shape: f32[2], index: 0, kind: input, shape index: {}]
  %s1 = inlined_call_operand.hbm [shape: f32[2,8,256], index: 1, kind: input, shape index: {}]
  %s2 = inlined_call_operand.hbm [shape: f32[2,8,256], index: 2, kind: input, shape index: {}]
  %s3 = inlined_call_operand.vmem [shape: bf16[8,72], index: 3, kind: input, shape index: {}]
  %s4 = inlined_call_operand.vmem [shape: f32[9,1,256], index: 4, kind: input, shape index: {}]
  %s5 = inlined_call_operand.vmem [shape: f32[8,1], index: 5, kind: input, shape index: {}]
  %s6 = inlined_call_operand.vmem [shape: f32[8,1], index: 6, kind: input, shape index: {}]
  %s7 = inlined_call_operand.hbm [shape: f32[2,8,256], index: 7, kind: output, shape index: {}]
  %s8 = sld [smem:[#allocation0]]
  $region73: #{tpu_custom_call.1} parent=0
    _
  %s10 = ssub.s32 1, %s8
  %s11 = scalar_select 0, %s10, %s8
  $region1: #{tpu_custom_call.1} parent=0
    #allocation2 [shape = 'u8[512]{0}', space=smem, size = 0x200, scoped, tag = 'input window, operand 0, single buffered']
    #allocation3 [shape = 's32[2]{0}', space=sflag, size = 0x8, scoped, tag = 'scoped memory for tpu_custom_call.1']
    #allocation4 [shape = 's32[2]{0}', space=sflag, size = 0x8, scoped, tag = 'scoped memory for tpu_custom_call.1']
    #allocation5 [shape = 's32[2]{0}', space=sflag, size = 0x8, scoped, tag = 'scoped memory for tpu_custom_call.1']
    #allocation6 [shape = 'u8[16384]{0}', space=vmem, size = 0x4000, scoped, tag = 'input window, operand 1']
    #allocation7 [shape = 'u8[16384]{0}', space=vmem, size = 0x4000, scoped, tag = 'input window, operand 2']
    #allocation8 [shape = 's32[2]{0}', space=sflag, size = 0x8, scoped, tag = 'scoped memory for tpu_custom_call.1']
    #allocation9 [shape = 'u8[16384]{0}', space=vmem, size = 0x4000, scoped, tag = 'output window, operand 0']
    %12 = vsyncpa [#allocation5], 0
    %13 = vsyncpa [#allocation3], 0
    %s14 = scalar_lea.sflag [#allocation3], 1
    %15 = vsyncpa %s14, 0
    %16 = vsyncpa [#allocation8], 0
    %s17 = scalar_lea.sflag [#allocation8], 1
    %18 = vsyncpa %s17, 0
    %19 = vsyncpa [#allocation4], 0
    %s20 = scalar_lea.sflag [#allocation4], 1
    %21 = vsyncpa %s20, 0
    loop: start=0, step=1, limit=4
    $region2: #{tpu_custom_call.1} parent=1 // loop_pre_header
      _
    $region3: #{tpu_custom_call.1} parent=1 // loop_header
      %s23 = sphi 0, %s27
      %p24 = scmp.ge.s32.totalorder %s23, 4
      %s31 = sphi 0, %s31
      %s33 = sphi 0, %s31
      %s34 = sphi 0, %s33
      %s48 = sphi 0, %s34
      %s54 = sphi 0, %s56
      %s57 = sphi 0, %s54
      %s58 = sphi 0, %s57
      %s74 = sphi 0, %s58
      %s80 = sphi 0, %s82
      %s83 = sphi 0, %s80
      %s84 = sphi 0, %s83
      %s100 = sphi 0, %s84
      %s104 = sphi 0, %s104
      %s106 = sphi 0, %s104
      %s107 = sphi 0, %s106
      %s121 = sphi 0, %s107
      %s125 = sphi 0, %s125
      %s127 = sphi 0, %s125
      %s128 = sphi 0, %s127
      %s142 = sphi 0, %s128
      %s146 = sphi 0, %s146
      %s148 = sphi 0, %s146
      %s149 = sphi 0, %s148
      %s163 = sphi 0, %s149
      %s167 = sphi 0, %s167
      %s169 = sphi 0, %s167
      %s170 = sphi 0, %s169
      %s184 = sphi 0, %s170
      %s190 = sphi 0, %s192
      %s193 = sphi 0, %s190
      %s194 = sphi 0, %s193
      %s210 = sphi 0, %s194
    $region4: #{tpu_custom_call.1} parent=1 // loop_header_branch
      %26 = sbr.rel (%p24) target = $region8
    $region5: #{tpu_custom_call.1} parent=1 // loop_body
      %s28 = ssub.s32 %s23, 1
      %s29 = ssub.s32 %s23, 2
      %s30 = sadd.s32 %s23, 1
      %s32 = sadd.s32 %s31, 1
      %p35 = scmp.eq.s32.totalorder %s23, 1
      %p36 = scmp.ne.s32.totalorder %s31, %s33
      %p37 = scmp.eq.s32.totalorder %s23, 0
      %p38 = por %p36, %p37
      %p39 = scmp.ne.s32.totalorder %s31, %s33
      %p40 = scmp.eq.s32.totalorder %s28, 1
      %p41 = por %p39, %p40
      %p42 = scmp.ne.s32.totalorder %s33, %s34
      %p43 = scmp.eq.s32.totalorder %s28, 0
      %p44 = por %p42, %p43
      %p45 = scmp.ne.s32.totalorder %s33, %s34
      %p46 = scmp.eq.s32.totalorder %s29, 1
      %p47 = por %p45, %p46
      %p49 = scmp.ne.s32.totalorder %s34, %s48
      %p50 = scmp.eq.s32.totalorder %s29, 0
      %p51 = por %p49, %p50
      %s52 = ssub.s32 %s23, %s30
      %p53 = scmp.eq.s32.totalorder %s52, 0
      %s55 = sadd.s32 %s54, 1
      %s56 = scalar_select %p53, %s54, %s55
      %p59 = pneg %p53
      %p60 = scmp.eq.s32.totalorder %s23, 1
      %p61 = por %p59, %p60
      %p62 = scmp.ne.s32.totalorder %s54, %s57
      %p63 = scmp.eq.s32.totalorder %s23, 0
      %p64 = por %p62, %p63
      %p65 = scmp.ne.s32.totalorder %s54, %s57
      %p66 = scmp.eq.s32.totalorder %s28, 1
      %p67 = por %p65, %p66
      %p68 = scmp.ne.s32.totalorder %s57, %s58
      %p69 = scmp.eq.s32.totalorder %s28, 0
      %p70 = por %p68, %p69
      %p71 = scmp.ne.s32.totalorder %s57, %s58
      %p72 = scmp.eq.s32.totalorder %s29, 1
      %p73 = por %p71, %p72
      %p75 = scmp.ne.s32.totalorder %s58, %s74
      %p76 = scmp.eq.s32.totalorder %s29, 0
      %p77 = por %p75, %p76
      %s78 = ssub.s32 %s23, %s30
      %p79 = scmp.eq.s32.totalorder %s78, 0
      %s81 = sadd.s32 %s80, 1
      %s82 = scalar_select %p79, %s80, %s81
      %p85 = pneg %p79
      %p86 = scmp.eq.s32.totalorder %s23, 1
      %p87 = por %p85, %p86
      %p88 = scmp.ne.s32.totalorder %s80, %s83
      %p89 = scmp.eq.s32.totalorder %s23, 0
      %p90 = por %p88, %p89
      %p91 = scmp.ne.s32.totalorder %s80, %s83
      %p92 = scmp.eq.s32.totalorder %s28, 1
      %p93 = por %p91, %p92
      %p94 = scmp.ne.s32.totalorder %s83, %s84
      %p95 = scmp.eq.s32.totalorder %s28, 0
      %p96 = por %p94, %p95
      %p97 = scmp.ne.s32.totalorder %s83, %s84
      %p98 = scmp.eq.s32.totalorder %s29, 1
      %p99 = por %p97, %p98
      %p101 = scmp.ne.s32.totalorder %s84, %s100
      %p102 = scmp.eq.s32.totalorder %s29, 0
      %p103 = por %p101, %p102
      %s105 = sadd.s32 %s104, 1
      %p108 = scmp.eq.s32.totalorder %s23, 1
      %p109 = scmp.ne.s32.totalorder %s104, %s106
      %p110 = scmp.eq.s32.totalorder %s23, 0
      %p111 = por %p109, %p110
      %p112 = scmp.ne.s32.totalorder %s104, %s106
      %p113 = scmp.eq.s32.totalorder %s28, 1
      %p114 = por %p112, %p113
      %p115 = scmp.ne.s32.totalorder %s106, %s107
      %p116 = scmp.eq.s32.totalorder %s28, 0
      %p117 = por %p115, %p116
      %p118 = scmp.ne.s32.totalorder %s106, %s107
      %p119 = scmp.eq.s32.totalorder %s29, 1
      %p120 = por %p118, %p119
      %p122 = scmp.ne.s32.totalorder %s107, %s121
      %p123 = scmp.eq.s32.totalorder %s29, 0
      %p124 = por %p122, %p123
      %s126 = sadd.s32 %s125, 1
      %p129 = scmp.eq.s32.totalorder %s23, 1
      %p130 = scmp.ne.s32.totalorder %s125, %s127
      %p131 = scmp.eq.s32.totalorder %s23, 0
      %p132 = por %p130, %p131
      %p133 = scmp.ne.s32.totalorder %s125, %s127
      %p134 = scmp.eq.s32.totalorder %s28, 1
      %p135 = por %p133, %p134
      %p136 = scmp.ne.s32.totalorder %s127, %s128
      %p137 = scmp.eq.s32.totalorder %s28, 0
      %p138 = por %p136, %p137
      %p139 = scmp.ne.s32.totalorder %s127, %s128
      %p140 = scmp.eq.s32.totalorder %s29, 1
      %p141 = por %p139, %p140
      %p143 = scmp.ne.s32.totalorder %s128, %s142
      %p144 = scmp.eq.s32.totalorder %s29, 0
      %p145 = por %p143, %p144
      %s147 = sadd.s32 %s146, 1
      %p150 = scmp.eq.s32.totalorder %s23, 1
      %p151 = scmp.ne.s32.totalorder %s146, %s148
      %p152 = scmp.eq.s32.totalorder %s23, 0
      %p153 = por %p151, %p152
      %p154 = scmp.ne.s32.totalorder %s146, %s148
      %p155 = scmp.eq.s32.totalorder %s28, 1
      %p156 = por %p154, %p155
      %p157 = scmp.ne.s32.totalorder %s148, %s149
      %p158 = scmp.eq.s32.totalorder %s28, 0
      %p159 = por %p157, %p158
      %p160 = scmp.ne.s32.totalorder %s148, %s149
      %p161 = scmp.eq.s32.totalorder %s29, 1
      %p162 = por %p160, %p161
      %p164 = scmp.ne.s32.totalorder %s149, %s163
      %p165 = scmp.eq.s32.totalorder %s29, 0
      %p166 = por %p164, %p165
      %s168 = sadd.s32 %s167, 1
      %p171 = scmp.eq.s32.totalorder %s23, 1
      %p172 = scmp.ne.s32.totalorder %s167, %s169
      %p173 = scmp.eq.s32.totalorder %s23, 0
      %p174 = por %p172, %p173
      %p175 = scmp.ne.s32.totalorder %s167, %s169
      %p176 = scmp.eq.s32.totalorder %s28, 1
      %p177 = por %p175, %p176
      %p178 = scmp.ne.s32.totalorder %s169, %s170
      %p179 = scmp.eq.s32.totalorder %s28, 0
      %p180 = por %p178, %p179
      %p181 = scmp.ne.s32.totalorder %s169, %s170
      %p182 = scmp.eq.s32.totalorder %s29, 1
      %p183 = por %p181, %p182
      %p185 = scmp.ne.s32.totalorder %s170, %s184
      %p186 = scmp.eq.s32.totalorder %s29, 0
      %p187 = por %p185, %p186
      %s188 = ssub.s32 %s23, %s30
      %p189 = scmp.eq.s32.totalorder %s188, 0
      %s191 = sadd.s32 %s190, 1
      %s192 = scalar_select %p189, %s190, %s191
      %p195 = pneg %p189
      %p196 = scmp.eq.s32.totalorder %s23, 1
      %p197 = por %p195, %p196
      %p198 = scmp.ne.s32.totalorder %s190, %s193
      %p199 = scmp.eq.s32.totalorder %s23, 0
      %p200 = por %p198, %p199
      %p201 = scmp.ne.s32.totalorder %s190, %s193
      %p202 = scmp.eq.s32.totalorder %s28, 1
      %p203 = por %p201, %p202
      %p204 = scmp.ne.s32.totalorder %s193, %s194
      %p205 = scmp.eq.s32.totalorder %s28, 0
      %p206 = por %p204, %p205
      %p207 = scmp.ne.s32.totalorder %s193, %s194
      %p208 = scmp.eq.s32.totalorder %s29, 1
      %p209 = por %p207, %p208
      %p211 = scmp.ne.s32.totalorder %s194, %s210
      %p212 = scmp.eq.s32.totalorder %s29, 0
      %p213 = por %p211, %p212
      %p214 = scmp.le.s32.totalorder 1, %s23
      %p215 = scmp.lt.s32.totalorder %s23, 3
      %p216 = pnand %p214, %p215
      %p217 = pneg %p216
      // Predicated region
      $region9: #{tpu_custom_call.1} parent=5 // pred_check
        _
      $region10: #{tpu_custom_call.1} parent=5 // pred_check_branch
        %219 = sbr.rel (%p216) target = $region12
      $region11: #{tpu_custom_call.1} parent=5 // pred_region
        %s220 = ssub.s32 %s23, 1
        // Predicated region
        $region13: #{tpu_custom_call.1} parent=11 // pred_check
          %p221 = pneg %p44
        $region14: #{tpu_custom_call.1} parent=11 // pred_check_branch
          %223 = sbr.rel (%p221) target = $region16
        $region15: #{tpu_custom_call.1} parent=11 // pred_region
          %s225 = ssub.s32 16, 16
          %226 = vsyncadd [#allocation5], %s225
          %s228 = sshll.u32 %s0, 4
          %s229 = int_to_ptr.vmem [resolvable:$true] %s228
          %231 = dma.vmem_to_smem %s229, 16, [#allocation2], [#allocation5]
        $region16: #{tpu_custom_call.1} parent=11 // pred_fallthru
          _
        // Predicated region
        $region17: #{tpu_custom_call.1} parent=11 // pred_check
          %p232 = pneg %p117
        $region18: #{tpu_custom_call.1} parent=11 // pred_check_branch
          %234 = sbr.rel (%p232) target = $region20
        $region19: #{tpu_custom_call.1} parent=11 // pred_region
          _
        $region20: #{tpu_custom_call.1} parent=11 // pred_fallthru
          _
        // Predicated region
        $region21: #{tpu_custom_call.1} parent=11 // pred_check
          %p235 = pneg %p138
        $region22: #{tpu_custom_call.1} parent=11 // pred_check_branch
          %237 = sbr.rel (%p235) target = $region24
        $region23: #{tpu_custom_call.1} parent=11 // pred_region
          _
        $region24: #{tpu_custom_call.1} parent=11 // pred_fallthru
          _
        // Predicated region
        $region25: #{tpu_custom_call.1} parent=11 // pred_check
          %p238 = pneg %p159
        $region26: #{tpu_custom_call.1} parent=11 // pred_check_branch
          %240 = sbr.rel (%p238) target = $region28
        $region27: #{tpu_custom_call.1} parent=11 // pred_region
          _
        $region28: #{tpu_custom_call.1} parent=11 // pred_fallthru
          _
        // Predicated region
        $region29: #{tpu_custom_call.1} parent=11 // pred_check
          %p241 = pneg %p180
        $region30: #{tpu_custom_call.1} parent=11 // pred_check_branch
          %243 = sbr.rel (%p241) target = $region32
        $region31: #{tpu_custom_call.1} parent=11 // pred_region
          _
        $region32: #{tpu_custom_call.1} parent=11 // pred_fallthru
          _
      $region12: #{tpu_custom_call.1} parent=5 // pred_fallthru
        _
      %p244 = scmp.lt.s32.totalorder %s23, 2
      // Predicated region
      $region33: #{tpu_custom_call.1} parent=5 // pred_check
        %p245 = pneg %p244
      $region34: #{tpu_custom_call.1} parent=5 // pred_check_branch
        %247 = sbr.rel (%p245) target = $region36
      $region35: #{tpu_custom_call.1} parent=5 // pred_region
        // Predicated region
        $region37: #{tpu_custom_call.1} parent=35 // pred_check
          %p248 = pneg %p64
        $region38: #{tpu_custom_call.1} parent=35 // pred_check_branch
          %250 = sbr.rel (%p248) target = $region40
        $region39: #{tpu_custom_call.1} parent=35 // pred_region
          %s251 = sand.u32 %s54, 1
          %s252 = scalar_lea.sflag [#allocation3], %s251
          %s253 = sand.u32 %s54, 1
          %s254 = smul.addr %s253, 16
          %s255 = scalar_lea.vmem [#allocation6], %s254
          %s257 = ssub.s32 256, 256
          %258 = vsyncadd %s252, %s257
          %s259 = smul.addr %s23, 2
          %s260 = smul.addr %s259, 128
          %s261 = scalar_lea.hbm %s1, %s260
          %s263 = sshll.u32 %s255, 4
          %s264 = int_to_ptr.vmem [resolvable:$true] %s263
          %266 = dma.hbm_to_vmem [thread:$0]  %s261, 256, %s264, %s252
        $region40: #{tpu_custom_call.1} parent=35 // pred_fallthru
          _
        // Predicated region
        $region41: #{tpu_custom_call.1} parent=35 // pred_check
          %p267 = pneg %p90
        $region42: #{tpu_custom_call.1} parent=35 // pred_check_branch
          %269 = sbr.rel (%p267) target = $region44
        $region43: #{tpu_custom_call.1} parent=35 // pred_region
          %s270 = sand.u32 %s80, 1
          %s271 = scalar_lea.sflag [#allocation8], %s270
          %s272 = sand.u32 %s80, 1
          %s273 = smul.addr %s272, 16
          %s274 = scalar_lea.vmem [#allocation7], %s273
          %s276 = ssub.s32 256, 256
          %277 = vsyncadd %s271, %s276
          %s278 = smul.addr %s23, 2
          %s279 = smul.addr %s278, 128
          %s280 = scalar_lea.hbm %s2, %s279
          %s282 = sshll.u32 %s274, 4
          %s283 = int_to_ptr.vmem [resolvable:$true] %s282
          %285 = dma.hbm_to_vmem [thread:$0]  %s280, 256, %s283, %s271
        $region44: #{tpu_custom_call.1} parent=35 // pred_fallthru
          _
      $region36: #{tpu_custom_call.1} parent=5 // pred_fallthru
        _
      %p286 = scmp.le.s32.totalorder 1, %s23
      %p287 = scmp.lt.s32.totalorder %s23, 3
      %p288 = pnand %p286, %p287
      %p289 = pneg %p288
      // Predicated region
      $region45: #{tpu_custom_call.1} parent=5 // pred_check
        _
      $region46: #{tpu_custom_call.1} parent=5 // pred_check_branch
        %291 = sbr.rel (%p288) target = $region48
      $region47: #{tpu_custom_call.1} parent=5 // pred_region
        %s292 = ssub.s32 %s23, 1
        // Predicated region
        $region49: #{tpu_custom_call.1} parent=47 // pred_check
          %p293 = pneg %p44
        $region50: #{tpu_custom_call.1} parent=47 // pred_check_branch
          %295 = sbr.rel (%p293) target = $region52
        $region51: #{tpu_custom_call.1} parent=47 // pred_region
          %296 = dma.done [#allocation5], 16
        $region52: #{tpu_custom_call.1} parent=47 // pred_fallthru
          _
        %s297 = sand.u32 %s57, 1
        %s298 = scalar_lea.sflag [#allocation3], %s297
        %s299 = sand.u32 %s57, 1
        %s300 = smul.addr %s299, 16
        %s301 = scalar_lea.vmem [#allocation6], %s300
        // Predicated region
        $region53: #{tpu_custom_call.1} parent=47 // pred_check
          %p302 = pneg %p70
        $region54: #{tpu_custom_call.1} parent=47 // pred_check_branch
          %304 = sbr.rel (%p302) target = $region56
        $region55: #{tpu_custom_call.1} parent=47 // pred_region
          %305 = dma.done %s298, 256
        $region56: #{tpu_custom_call.1} parent=47 // pred_fallthru
          _
        %s306 = sand.u32 %s83, 1
        %s307 = scalar_lea.sflag [#allocation8], %s306
        %s308 = sand.u32 %s83, 1
        %s309 = smul.addr %s308, 16
        %s310 = scalar_lea.vmem [#allocation7], %s309
        // Predicated region
        $region57: #{tpu_custom_call.1} parent=47 // pred_check
          %p311 = pneg %p96
        $region58: #{tpu_custom_call.1} parent=47 // pred_check_branch
          %313 = sbr.rel (%p311) target = $region60
        $region59: #{tpu_custom_call.1} parent=47 // pred_region
          %314 = dma.done %s307, 256
        $region60: #{tpu_custom_call.1} parent=47 // pred_fallthru
          _
        %315 = sfence
        %p316 = pneg %p44
        %p317 = pneg %p41
        %s318 = sand.u32 %s57, 1
        %s319 = scalar_lea.sflag [#allocation3], %s318
        %s320 = sand.u32 %s57, 1
        %s321 = smul.addr %s320, 16
        %s322 = scalar_lea.vmem [#allocation6], %s321
        %p323 = pneg %p70
        %p324 = pneg %p67
        %s325 = sand.u32 %s83, 1
        %s326 = scalar_lea.sflag [#allocation8], %s325
        %s327 = sand.u32 %s83, 1
        %s328 = smul.addr %s327, 16
        %s329 = scalar_lea.vmem [#allocation7], %s328
        %p330 = pneg %p96
        %p331 = pneg %p93
        %p332 = pneg %p117
        %p333 = pneg %p114
        %p334 = pneg %p138
        %p335 = pneg %p135
        %p336 = pneg %p159
        %p337 = pneg %p156
        %p338 = pneg %p180
        %p339 = pneg %p177
        %p340 = pneg %p206
        %p341 = pneg %p203
        %s342 = sand.u32 %s193, 1
        %s343 = scalar_lea.sflag [#allocation4], %s342
        %s344 = sand.u32 %s193, 1
        %s345 = smul.addr %s344, 16
        %s346 = scalar_lea.vmem [#allocation9], %s345
        %s348 = sld [smem:[#allocation2]]
        %s349 = smax.f32 %s348, 0.0
        %s350 = sld [smem:[#allocation2 + $0x1]]
        %s351 = smax.f32 %s350, 0.0
        %s352 = sadd.f32 %s349, %s351
        %s353 = sadd.f32 %s352, 0.0001
        %v354 = vstv %s353
        %v355 = vrcp.pop %v354
        %s356 = vtos %v355
        %s357 = smul.f32 %s349, %s356
        %v358 = vld [vmem:[%s301] sm:$0xff]
        %v359 = vld [vmem:[%s301 + $0x8] sm:$0xff]
        %v360 = vstv %s357
        %v361 = vmul.f32 %v360, %v358
        %v362 = vmul.f32 %v360, %v359
        %v363 = vstv %s353
        %v364 = vrcp.pop %v363
        %s365 = vtos %v364
        %s366 = smul.f32 %s351, %s365
        %v367 = vld [vmem:[%s310] sm:$0xff]
        %v368 = vld [vmem:[%s310 + $0x8] sm:$0xff]
        %v369 = vstv %s366
        %v370 = vmul.f32 %v369, %v367
        %v371 = vmul.f32 %v369, %v368
        %v372 = vadd.f32 %v361, %v370
        %v373 = vadd.f32 %v362, %v371
        %v374 = vxor.u32 %v372, 2147483648
        %v375 = vxor.u32 %v373, 2147483648
        %v376 = vmul.f32 %v374, 1.442695
        %v377 = vpow.pop %v376
        %v378 = vmul.f32 %v375, 1.442695
        %v379 = vpow.pop %v378
        %v380 = vadd.f32 %v377, 1.0
        %v381 = vadd.f32 %v379, 1.0
        %v382 = vrcp.pop %v380
        %v383 = vmul.f32 1.0, %v382
        %v384 = vrcp.pop %v381
        %v385 = vmul.f32 1.0, %v384
        %v386 = vmul.f32 %v372, %v383
        %v387 = vmul.f32 %v373, %v385
        %390 = vrot.lane.b32.xlu0 %v386, 17
        %v391 = vpop.permute.xlu0 %390
        %392 = vrot.lane.b32.xlu0 %v387, 17
        %v393 = vpop.permute.xlu0 %392
        %vm394 = vcmask 138240
        %v395 = vsel %vm394, %v391, %v393
        %v399 = vsel %vm394, 0.0, %v391
        %v400 = vsel %vm394, %v393, 0.0
        %v401 = vld [vmem:[%s4] sm:$0x3]
        %v403 = vlaneseq
        %v404 = vshrl.u32 %v403, 7
        %v405 = vsub.s32 0, %v404
        %v406 = vrot.slane %v401, %v405
        %v407 = vlaneseq
        %v408 = vshrl.u32 %v407, 7
        %v409 = vsub.s32 1, %v408
        %v410 = vrot.slane %v401, %v409
        %v413 = vmul.f32 %v399, %v406
        %v414 = vmul.f32 %v395, %v410
        %v415 = vpack.c.bf16 %v413, %v413
        %v416 = vpack.c.bf16 %v414, %v414
        %s417 = scalar_lea.vmem %s4, 2
        %v418 = vld [vmem:[%s417] sm:$0x3]
        %v420 = vlaneseq
        %v421 = vshrl.u32 %v420, 7
        %v422 = vsub.s32 0, %v421
        %v423 = vrot.slane %v418, %v422
        %v424 = vlaneseq
        %v425 = vshrl.u32 %v424, 7
        %v426 = vsub.s32 1, %v425
        %v427 = vrot.slane %v418, %v426
        %428 = vrot.lane.b32.xlu0 %v423, 1
        %v429 = vpop.permute.xlu0 %428
        %430 = vrot.lane.b32.xlu0 %v427, 1
        %v431 = vpop.permute.xlu0 %430
        %vm432 = vcmask 7168
        %v433 = vsel %vm432, %v429, %v431
        %v437 = vmul.f32 %v399, %v429
        %v438 = vmul.f32 %v395, %v433
        %v439 = vmul.f32 %v400, %v431
        %v440 = vpack.c.bf16 %v437, %v437
        %v441 = vpack.c.bf16 %v438, %v438
        %v442 = vpack.c.bf16 %v439, %v439
        %s443 = scalar_lea.vmem %s4, 4
        %v444 = vld [vmem:[%s443] sm:$0x3]
        %v446 = vlaneseq
        %v447 = vshrl.u32 %v446, 7
        %v448 = vsub.s32 0, %v447
        %v449 = vrot.slane %v444, %v448
        %v450 = vlaneseq
        %v451 = vshrl.u32 %v450, 7
        %v452 = vsub.s32 1, %v451
        %v453 = vrot.slane %v444, %v452
        %454 = vrot.lane.b32.xlu0 %v449, 2
        %v455 = vpop.permute.xlu0 %454
        %456 = vrot.lane.b32.xlu0 %v453, 2
        %v457 = vpop.permute.xlu0 %456
        %vm458 = vcmask 15360
        %v459 = vsel %vm458, %v455, %v457
        %v463 = vmul.f32 %v399, %v455
        %v464 = vmul.f32 %v395, %v459
        %v465 = vmul.f32 %v400, %v457
        %v466 = vpack.c.bf16 %v463, %v463
        %v467 = vpack.c.bf16 %v464, %v464
        %v468 = vpack.c.bf16 %v465, %v465
        %s469 = scalar_lea.vmem %s4, 6
        %v470 = vld [vmem:[%s469] sm:$0x3]
        %v472 = vlaneseq
        %v473 = vshrl.u32 %v472, 7
        %v474 = vsub.s32 0, %v473
        %v475 = vrot.slane %v470, %v474
        %v476 = vlaneseq
        %v477 = vshrl.u32 %v476, 7
        %v478 = vsub.s32 1, %v477
        %v479 = vrot.slane %v470, %v478
        %480 = vrot.lane.b32.xlu0 %v475, 16
        %v481 = vpop.permute.xlu0 %480
        %482 = vrot.lane.b32.xlu0 %v479, 16
        %v483 = vpop.permute.xlu0 %482
        %vm484 = vcmask 130048
        %v485 = vsel %vm484, %v481, %v483
        %v489 = vmul.f32 %v399, %v481
        %v490 = vmul.f32 %v395, %v485
        %v491 = vmul.f32 %v400, %v483
        %v492 = vpack.c.bf16 %v489, %v489
        %v493 = vpack.c.bf16 %v490, %v490
        %v494 = vpack.c.bf16 %v491, %v491
        %s495 = scalar_lea.vmem %s4, 8
        %v496 = vld [vmem:[%s495] sm:$0x3]
        %v498 = vlaneseq
        %v499 = vshrl.u32 %v498, 7
        %v500 = vsub.s32 0, %v499
        %v501 = vrot.slane %v496, %v500
        %v502 = vlaneseq
        %v503 = vshrl.u32 %v502, 7
        %v504 = vsub.s32 1, %v503
        %v505 = vrot.slane %v496, %v504
        %506 = vrot.lane.b32.xlu0 %v501, 17
        %v507 = vpop.permute.xlu0 %506
        %508 = vrot.lane.b32.xlu0 %v505, 17
        %v509 = vpop.permute.xlu0 %508
        %v510 = vsel %vm394, %v507, %v509
        %v514 = vmul.f32 %v399, %v507
        %v515 = vmul.f32 %v395, %v510
        %v516 = vmul.f32 %v400, %v509
        %v517 = vpack.c.bf16 %v514, %v514
        %v518 = vpack.c.bf16 %v515, %v515
        %v519 = vpack.c.bf16 %v516, %v516
        %s520 = scalar_lea.vmem %s4, 10
        %v521 = vld [vmem:[%s520] sm:$0x3]
        %v523 = vlaneseq
        %v524 = vshrl.u32 %v523, 7
        %v525 = vsub.s32 0, %v524
        %v526 = vrot.slane %v521, %v525
        %v527 = vlaneseq
        %v528 = vshrl.u32 %v527, 7
        %v529 = vsub.s32 1, %v528
        %v530 = vrot.slane %v521, %v529
        %531 = vrot.lane.b32.xlu0 %v526, 18
        %v532 = vpop.permute.xlu0 %531
        %533 = vrot.lane.b32.xlu0 %v530, 18
        %v534 = vpop.permute.xlu0 %533
        %vm535 = vcmask 146432
        %v536 = vsel %vm535, %v532, %v534
        %v540 = vmul.f32 %v399, %v532
        %v541 = vmul.f32 %v395, %v536
        %v542 = vmul.f32 %v400, %v534
        %v543 = vpack.c.bf16 %v540, %v540
        %v544 = vpack.c.bf16 %v541, %v541
        %v545 = vpack.c.bf16 %v542, %v542
        %s546 = scalar_lea.vmem %s4, 12
        %v547 = vld [vmem:[%s546] sm:$0x3]
        %v549 = vlaneseq
        %v550 = vshrl.u32 %v549, 7
        %v551 = vsub.s32 0, %v550
        %v552 = vrot.slane %v547, %v551
        %v553 = vlaneseq
        %v554 = vshrl.u32 %v553, 7
        %v555 = vsub.s32 1, %v554
        %v556 = vrot.slane %v547, %v555
        %557 = vrot.lane.b32.xlu0 %v552, 32
        %v558 = vpop.permute.xlu0 %557
        %559 = vrot.lane.b32.xlu0 %v556, 32
        %v560 = vpop.permute.xlu0 %559
        %vm561 = vcmask 261120
        %v562 = vsel %vm561, %v558, %v560
        %v566 = vmul.f32 %v399, %v558
        %v567 = vmul.f32 %v395, %v562
        %v568 = vmul.f32 %v400, %v560
        %v569 = vpack.c.bf16 %v566, %v566
        %v570 = vpack.c.bf16 %v567, %v567
        %v571 = vpack.c.bf16 %v568, %v568
        %s572 = scalar_lea.vmem %s4, 14
        %v573 = vld [vmem:[%s572] sm:$0x3]
        %v575 = vlaneseq
        %v576 = vshrl.u32 %v575, 7
        %v577 = vsub.s32 0, %v576
        %v578 = vrot.slane %v573, %v577
        %v579 = vlaneseq
        %v580 = vshrl.u32 %v579, 7
        %v581 = vsub.s32 1, %v580
        %v582 = vrot.slane %v573, %v581
        %583 = vrot.lane.b32.xlu0 %v578, 33
        %v584 = vpop.permute.xlu0 %583
        %585 = vrot.lane.b32.xlu0 %v582, 33
        %v586 = vpop.permute.xlu0 %585
        %vm587 = vcmask 269312
        %v588 = vsel %vm587, %v584, %v586
        %v592 = vmul.f32 %v399, %v584
        %v593 = vmul.f32 %v395, %v588
        %v594 = vmul.f32 %v400, %v586
        %v595 = vpack.c.bf16 %v592, %v592
        %v596 = vpack.c.bf16 %v593, %v593
        %v597 = vpack.c.bf16 %v594, %v594
        %s598 = scalar_lea.vmem %s4, 16
        %v599 = vld [vmem:[%s598] sm:$0x3]
        %v601 = vlaneseq
        %v602 = vshrl.u32 %v601, 7
        %v603 = vsub.s32 0, %v602
        %v604 = vrot.slane %v599, %v603
        %v605 = vlaneseq
        %v606 = vshrl.u32 %v605, 7
        %v607 = vsub.s32 1, %v606
        %v608 = vrot.slane %v599, %v607
        %609 = vrot.lane.b32.xlu0 %v604, 34
        %v610 = vpop.permute.xlu0 %609
        %611 = vrot.lane.b32.xlu0 %v608, 34
        %v612 = vpop.permute.xlu0 %611
        %vm613 = vcmask 277504
        %v614 = vsel %vm613, %v610, %v612
        %v618 = vmul.f32 %v399, %v610
        %v619 = vmul.f32 %v395, %v614
        %v620 = vmul.f32 %v400, %v612
        %v621 = vpack.c.bf16 %v618, %v618
        %v622 = vpack.c.bf16 %v619, %v619
        %v623 = vpack.c.bf16 %v620, %v620
        %v627 = vrot.slane %v440, 4
        %v628 = vrot.slane %v441, 4
        %v629 = vrot.slane %v442, 4
        %630 = vrot.lane.b32.xlu0 %v627, 127
        %v631 = vpop.permute.xlu0 %630
        %632 = vrot.lane.b32.xlu0 %v628, 127
        %v633 = vpop.permute.xlu0 %632
        %634 = vrot.lane.b32.xlu0 %v629, 127
        %v635 = vpop.permute.xlu0 %634
        %vm636 = vcmask 1039360
        %v637 = vsel %vm636, %v631, %v633
        %v638 = vsel %vm636, %v633, %v635
        %642 = vrot.lane.b32.xlu0 %v466, 126
        %v643 = vpop.permute.xlu0 %642
        %644 = vrot.lane.b32.xlu0 %v467, 126
        %v645 = vpop.permute.xlu0 %644
        %646 = vrot.lane.b32.xlu0 %v468, 126
        %v647 = vpop.permute.xlu0 %646
        %vm648 = vcmask 1031168
        %v649 = vsel %vm648, %v643, %v645
        %v650 = vsel %vm648, %v645, %v647
        %v654 = vrot.slane %v492, 4
        %v655 = vrot.slane %v493, 4
        %v656 = vrot.slane %v494, 4
        %657 = vrot.lane.b32.xlu0 %v654, 112
        %v658 = vpop.permute.xlu0 %657
        %659 = vrot.lane.b32.xlu0 %v655, 112
        %v660 = vpop.permute.xlu0 %659
        %661 = vrot.lane.b32.xlu0 %v656, 112
        %v662 = vpop.permute.xlu0 %661
        %vm663 = vcmask 916480
        %v664 = vsel %vm663, %v658, %v660
        %v665 = vsel %vm663, %v660, %v662
        %669 = vrot.lane.b32.xlu0 %v517, 111
        %v670 = vpop.permute.xlu0 %669
        %671 = vrot.lane.b32.xlu0 %v518, 111
        %v672 = vpop.permute.xlu0 %671
        %673 = vrot.lane.b32.xlu0 %v519, 111
        %v674 = vpop.permute.xlu0 %673
        %vm675 = vcmask 908288
        %v676 = vsel %vm675, %v670, %v672
        %v677 = vsel %vm675, %v672, %v674
        %v681 = vrot.slane %v543, 4
        %v682 = vrot.slane %v544, 4
        %v683 = vrot.slane %v545, 4
        %684 = vrot.lane.b32.xlu0 %v681, 110
        %v685 = vpop.permute.xlu0 %684
        %686 = vrot.lane.b32.xlu0 %v682, 110
        %v687 = vpop.permute.xlu0 %686
        %688 = vrot.lane.b32.xlu0 %v683, 110
        %v689 = vpop.permute.xlu0 %688
        %vm690 = vcmask 900096
        %v691 = vsel %vm690, %v685, %v687
        %v692 = vsel %vm690, %v687, %v689
        %696 = vrot.lane.b32.xlu0 %v569, 96
        %v697 = vpop.permute.xlu0 %696
        %698 = vrot.lane.b32.xlu0 %v570, 96
        %v699 = vpop.permute.xlu0 %698
        %700 = vrot.lane.b32.xlu0 %v571, 96
        %v701 = vpop.permute.xlu0 %700
        %vm702 = vcmask 785408
        %v703 = vsel %vm702, %v697, %v699
        %v704 = vsel %vm702, %v699, %v701
        %v708 = vrot.slane %v595, 4
        %v709 = vrot.slane %v596, 4
        %v710 = vrot.slane %v597, 4
        %711 = vrot.lane.b32.xlu0 %v708, 95
        %v712 = vpop.permute.xlu0 %711
        %713 = vrot.lane.b32.xlu0 %v709, 95
        %v714 = vpop.permute.xlu0 %713
        %715 = vrot.lane.b32.xlu0 %v710, 95
        %v716 = vpop.permute.xlu0 %715
        %vm717 = vcmask 777216
        %v718 = vsel %vm717, %v712, %v714
        %v719 = vsel %vm717, %v714, %v716
        %723 = vrot.lane.b32.xlu0 %v621, 94
        %v724 = vpop.permute.xlu0 %723
        %725 = vrot.lane.b32.xlu0 %v622, 94
        %v726 = vpop.permute.xlu0 %725
        %727 = vrot.lane.b32.xlu0 %v623, 94
        %v728 = vpop.permute.xlu0 %727
        %vm729 = vcmask 769024
        %v730 = vsel %vm729, %v724, %v726
        %v731 = vsel %vm729, %v726, %v728
        %vm732 = vcmask 1043456
        %v735 = vsel %vm732, %v415, %v637
        %v739 = vsel %vm732, %v416, %v638
        %v743 = vsel %vm732, %v649, %v664
        %v747 = vsel %vm732, %v650, %v665
        %v751 = vsel %vm732, %v676, %v691
        %v755 = vsel %vm732, %v677, %v692
        %v759 = vsel %vm732, %v703, %v718
        %v763 = vsel %vm732, %v704, %v719
        %v765 = vld [vmem:[%s3] sm:$0xf]
        %vm766 = vcmask 588800
        %v768 = vsel %vm766, %v765, 0
        %v771 = vsel %vm732, %v730, 0
        %v774 = vsel %vm732, %v731, 0
        %776 = vmatprep.subr.bf16.mxu0 %v739
        %777 = vmatpush1.bf16.msra.mxu0 %v735
        %778 = vmatprep.subr.bf16.mxu0 %v747
        %779 = vmatpush1.bf16.msra.mxu0 %v743
        %780 = vmatprep.subr.bf16.mxu0 %v755
        %781 = vmatpush1.bf16.msra.mxu0 %v751
        %782 = vmatprep.subr.bf16.mxu0 %v763
        %783 = vmatpush1.bf16.msra.mxu0 %v759
        %784 = vmatprep.subr.bf16.mxu0 %v774
        %785 = vmatpush1.bf16.msra.mxu0 %v771
        %786 = vmatprep.subr.bf16.mxu0 0
        %787 = vmatpush1.bf16.msra.mxu0 0
        %788 = vmatprep.subr.bf16.mxu0 0
        %789 = vmatpush1.bf16.msra.mxu0 0
        %790 = vmatprep.subr.bf16.mxu0 0
        %791 = vmatpush1.bf16.msra.mxu0 0
        %792 = vmatprep.subr.bf16.mxu0 0
        %793 = vmatpush1.bf16.msra.mxu0 0
        %794 = vmatprep.subr.bf16.mxu0 0
        %795 = vmatpush1.bf16.msra.mxu0 0
        %796 = vmatprep.subr.bf16.mxu0 0
        %797 = vmatpush1.bf16.msra.mxu0 0
        %798 = vmatprep.subr.bf16.mxu0 0
        %799 = vmatpush1.bf16.msra.mxu0 0
        %800 = vmatprep.subr.bf16.mxu0 0
        %801 = vmatpush1.bf16.msra.mxu0 0
        %802 = vmatprep.subr.bf16.mxu0 0
        %803 = vmatpush1.bf16.msra.mxu0 0
        %804 = vmatprep.subr.bf16.mxu0 0
        %805 = vmatpush1.bf16.msra.mxu0 0
        %806 = vmatprep.subr.bf16.mxu0 0
        %807 = vmatpush1.bf16.msra.mxu0 0
        %808 = vmatprep.mubr.bf16.mxu0 0
        %809 = vmatmul.mubr.bf16.gmra.mrb[0].mxu0 %v768
        %v810 = vpop.f32.mrb[0].mxu0
        %v811 = vadd.f32 0.0, %v810
        %v812 = vpop.f32.mrb[0].mxu0
        %v813 = vadd.f32 0.0, %v812
        %v814 = vpop.f32.mrb[0].mxu0
        %v815 = vpop.f32.mrb[0].mxu0
        %816 = vdwg.mxu0
        %v817 = vld [vmem:[%s5] sm:$0xff]
        %819 = vset.pattern.permute.xlu0 0
        %820 = vperm.xlu0 %819, %v817
        %v821 = vpop.permute.xlu0 %820
        %v823 = vmul.f32 %v811, %v821
        %v824 = vmul.f32 %v813, %v821
        %v825 = vld [vmem:[%s6] sm:$0xff]
        %827 = vset.pattern.permute.xlu0 0
        %828 = vperm.xlu0 %827, %v825
        %v829 = vpop.permute.xlu0 %828
        %v831 = vadd.f32 %v823, %v829
        %v832 = vadd.f32 %v824, %v829
        %833 = vst [vmem:[%s346] sm:$0xff] %v831
        %834 = vst [vmem:[%s346 + $0x8] sm:$0xff] %v832
        %s835 = sand.u32 %s193, 1
        %s836 = scalar_lea.sflag [#allocation4], %s835
        %s837 = sand.u32 %s193, 1
        %s838 = smul.addr %s837, 16
        %s839 = scalar_lea.vmem [#allocation9], %s838
        // Predicated region
        $region61: #{tpu_custom_call.1} parent=47 // pred_check
          %p840 = pneg %p203
        $region62: #{tpu_custom_call.1} parent=47 // pred_check_branch
          %842 = sbr.rel (%p840) target = $region64
        $region63: #{tpu_custom_call.1} parent=47 // pred_region
          %s844 = ssub.s32 256, 256
          %845 = vsyncadd %s836, %s844
          %s846 = smul.addr %s28, 2
          %s847 = smul.addr %s846, 128
          %s848 = scalar_lea.hbm %s7, %s847
          %s850 = sshll.u32 %s839, 4
          %s851 = int_to_ptr.vmem [resolvable:$true] %s850
          %853 = dma.vmem_to_hbm [thread:$0]  %s851, 256, %s848, %s836
        $region64: #{tpu_custom_call.1} parent=47 // pred_fallthru
          _
      $region48: #{tpu_custom_call.1} parent=5 // pred_fallthru
        _
      %p854 = scmp.le.s32.totalorder 2, %s23
      // Predicated region
      $region65: #{tpu_custom_call.1} parent=5 // pred_check
        %p855 = pneg %p854
      $region66: #{tpu_custom_call.1} parent=5 // pred_check_branch
        %857 = sbr.rel (%p855) target = $region68
      $region67: #{tpu_custom_call.1} parent=5 // pred_region
        %s858 = ssub.s32 %s23, 2
        // Predicated region
        $region69: #{tpu_custom_call.1} parent=67 // pred_check
          %p859 = pneg %p209
        $region70: #{tpu_custom_call.1} parent=67 // pred_check_branch
          %861 = sbr.rel (%p859) target = $region72
        $region71: #{tpu_custom_call.1} parent=67 // pred_region
          %s862 = sand.u32 %s194, 1
          %s863 = scalar_lea.sflag [#allocation4], %s862
          %s864 = sand.u32 %s194, 1
          %s865 = smul.addr %s864, 16
          %s866 = scalar_lea.vmem [#allocation9], %s865
          %867 = dma.done %s863, 256
        $region72: #{tpu_custom_call.1} parent=67 // pred_fallthru
          _
      $region68: #{tpu_custom_call.1} parent=5 // pred_fallthru
        _
    $region6: #{tpu_custom_call.1} parent=1 // loop_footer
      %s27 = sadd.s32 1, %s23
    $region7: #{tpu_custom_call.1} parent=1 // loop_footer_branch
      %22 = sbr.rel target = $region3
    $region8: #{tpu_custom_call.1} parent=1 // loop_exit
      _
    %868 = vsyncpa [#allocation3], 1
    %s869 = scalar_lea.sflag [#allocation3], 1
    %870 = vsyncpa %s869, 1
    %871 = vsyncpa [#allocation8], 1
    %s872 = scalar_lea.sflag [#allocation8], 1
    %873 = vsyncpa %s872, 1
    %874 = vsyncpa [#allocation4], 1
    %s875 = scalar_lea.sflag [#allocation4], 1
    %876 = vsyncpa %s875, 1
    %877 = vsyncpa [#allocation5], 1
    %s878 = scalar_lea.sflag [#allocation5], 1
    %879 = vsyncpa %s878, 1

</llo_original>
